<compile_context>
chip_gen: v5e
topology: v5e:2x2
jax: 0.10.0
libtpu: 0.0.40
codegen_flags: <defaults>
</compile_context>

<pallas_src>
import functools

import jax
import jax.numpy as jnp
from jax.experimental import pallas as pl
from jax.experimental.pallas import tpu as pltpu


# ----------------------------------------------------------------------------
# tiling helpers
# ----------------------------------------------------------------------------
_VMEM_BUDGET = 24 * 1024 * 1024  # conservative: fits the 32 MiB scoped default


def _round_up(x, m):
    return ((x + m - 1) // m) * m


def _choose_tm(m, per_row_bytes, resident_bytes, target=512):
    """Row tile: as large as possible (<= target, multiple of 8) within budget."""
    assert resident_bytes < _VMEM_BUDGET, (
        "weight too large to keep VMEM-resident; re-introduce a K grid axis")
    tm = min(target, _round_up(m, 8))
    while tm > 8 and resident_bytes + tm * per_row_bytes > _VMEM_BUDGET:
        tm //= 2
    return max(tm, 8)


def _pad_rows(a, m_pad):
    if a.shape[0] == m_pad:
        return a
    return jnp.pad(a, ((0, m_pad - a.shape[0]), (0, 0)))


# ----------------------------------------------------------------------------
# Resident-weight linear: y = act(x @ w + b)   (bf16 operands, f32 epilogue)
# ----------------------------------------------------------------------------
def _linear_kernel(x_ref, w_ref, b_ref, o_ref, *, act):
    y = jnp.dot(x_ref[...], w_ref[...], preferred_element_type=jnp.float32)
    y = y + b_ref[...].astype(jnp.float32)
    if act == "tanh":
        y = jnp.tanh(y)
    elif act == "gelu":
        # TODO(synk): HF RoBERTa/PhoBERT uses erf-GELU; tanh approximation kept
        # here (synthetic weights; avoids relying on an erf lowering in Mosaic).
        y = jax.nn.gelu(y, approximate=True)
    o_ref[...] = y.astype(o_ref.dtype)


def linear(x, w, b, act="none", out_dtype=None):
    """y = act(x @ w + b); x:[M,K] bf16, w:[K,N] bf16 (VMEM-resident), b:[N] f32."""
    M, K = x.shape
    N = w.shape[1]
    out_dtype = out_dtype or x.dtype
    out_it = jnp.dtype(out_dtype).itemsize
    resident = 2 * K * N * w.dtype.itemsize + 2 * N * 4
    per_row = 2 * (K * x.dtype.itemsize + N * out_it)
    tm = _choose_tm(M, per_row, resident)
    m_pad = _round_up(M, tm)
    y = pl.pallas_call(
        functools.partial(_linear_kernel, act=act),
        grid=(m_pad // tm,),
        in_specs=[
            pl.BlockSpec((tm, K), lambda i: (i, 0)),
            pl.BlockSpec((K, N), lambda i: (0, 0)),     # weight stays resident
            pl.BlockSpec((1, N), lambda i: (0, 0)),
        ],
        out_specs=pl.BlockSpec((tm, N), lambda i: (i, 0)),
        out_shape=jax.ShapeDtypeStruct((m_pad, N), out_dtype),
        compiler_params=pltpu.CompilerParams(dimension_semantics=("parallel",)),
    )(_pad_rows(x, m_pad), w, b.reshape(1, N))
    return y if m_pad == M else y[:M]


# ----------------------------------------------------------------------------
# Resident-weight linear fused with residual-add + LayerNorm epilogue
#   out = LN((x @ w + b) + residual) * g + beta
# ----------------------------------------------------------------------------
def _linear_res_ln_kernel(x_ref, w_ref, b_ref, r_ref, g_ref, beta_ref, o_ref, *, eps):
    y = jnp.dot(x_ref[...], w_ref[...], preferred_element_type=jnp.float32)
    y = y + b_ref[...].astype(jnp.float32) + r_ref[...].astype(jnp.float32)
    mu = jnp.mean(y, axis=-1, keepdims=True)
    var = jnp.mean(jnp.square(y - mu), axis=-1, keepdims=True)
    y = (y - mu) * jax.lax.rsqrt(var + eps)
    o_ref[...] = (y * g_ref[...].astype(jnp.float32)
                  + beta_ref[...].astype(jnp.float32)).astype(o_ref.dtype)


def linear_res_ln(x, w, b, residual, g, beta, eps=1e-5, out_dtype=None):
    M, K = x.shape
    N = w.shape[1]
    out_dtype = out_dtype or residual.dtype
    out_it = jnp.dtype(out_dtype).itemsize
    resident = 2 * K * N * w.dtype.itemsize + 4 * N * 4
    per_row = 2 * (K * x.dtype.itemsize + N * residual.dtype.itemsize + N * out_it)
    tm = _choose_tm(M, per_row, resident)
    m_pad = _round_up(M, tm)
    y = pl.pallas_call(
        functools.partial(_linear_res_ln_kernel, eps=eps),
        grid=(m_pad // tm,),
        in_specs=[
            pl.BlockSpec((tm, K), lambda i: (i, 0)),
            pl.BlockSpec((K, N), lambda i: (0, 0)),
            pl.BlockSpec((1, N), lambda i: (0, 0)),
            pl.BlockSpec((tm, N), lambda i: (i, 0)),     # residual
            pl.BlockSpec((1, N), lambda i: (0, 0)),      # ln gamma
            pl.BlockSpec((1, N), lambda i: (0, 0)),      # ln beta
        ],
        out_specs=pl.BlockSpec((tm, N), lambda i: (i, 0)),
        out_shape=jax.ShapeDtypeStruct((m_pad, N), out_dtype),
        compiler_params=pltpu.CompilerParams(dimension_semantics=("parallel",)),
    )(_pad_rows(x, m_pad), w, b.reshape(1, N), _pad_rows(residual, m_pad),
      g.reshape(1, N), beta.reshape(1, N))
    return y if m_pad == M else y[:M]


# ----------------------------------------------------------------------------
# Standalone LayerNorm (embedding LN only), tiled over rows
# ----------------------------------------------------------------------------
def _ln_kernel(x_ref, g_ref, b_ref, o_ref, *, eps):
    x = x_ref[...].astype(jnp.float32)
    mu = jnp.mean(x, axis=-1, keepdims=True)
    var = jnp.mean(jnp.square(x - mu), axis=-1, keepdims=True)
    y = (x - mu) * jax.lax.rsqrt(var + eps)
    o_ref[...] = (y * g_ref[...].astype(jnp.float32)
                  + b_ref[...].astype(jnp.float32)).astype(o_ref.dtype)


def layernorm(x, g, b, eps=1e-5, out_dtype=None):
    M, H = x.shape
    out_dtype = out_dtype or x.dtype
    per_row = 2 * (H * x.dtype.itemsize + H * jnp.dtype(out_dtype).itemsize)
    tm = _choose_tm(M, per_row, 4 * H * 4)
    m_pad = _round_up(M, tm)
    y = pl.pallas_call(
        functools.partial(_ln_kernel, eps=eps),
        grid=(m_pad // tm,),
        in_specs=[
            pl.BlockSpec((tm, H), lambda i: (i, 0)),
            pl.BlockSpec((1, H), lambda i: (0, 0)),
            pl.BlockSpec((1, H), lambda i: (0, 0)),
        ],
        out_specs=pl.BlockSpec((tm, H), lambda i: (i, 0)),
        out_shape=jax.ShapeDtypeStruct((m_pad, H), out_dtype),
        compiler_params=pltpu.CompilerParams(dimension_semantics=("parallel",)),
    )(_pad_rows(x, m_pad), g.reshape(1, H), b.reshape(1, H))
    return y if m_pad == M else y[:M]


# ----------------------------------------------------------------------------
# Multi-head self-attention; grid over (batch, heads), head-major blocks.
# q already carries the 1/sqrt(dh) scale (folded into wqkv at init).
# ----------------------------------------------------------------------------
def _attention_kernel(bias_ref, q_ref, k_ref, v_ref, o_ref):
    q = q_ref[...][0, 0]                 # [S, dh] bf16 (pre-scaled)
    k = k_ref[...][0, 0]                 # [S, dh] bf16
    v = v_ref[...][0, 0]                 # [S, dh] bf16
    bias = bias_ref[...][0]              # [1, S] f32 additive mask (per batch)
    # scores = q @ k^T without materializing a transpose
    s = jax.lax.dot_general(q, k, (((1,), (1,)), ((), ())),
                            preferred_element_type=jnp.float32)
    s = s + bias
    m = jnp.max(s, axis=-1, keepdims=True)
    p = jnp.exp(s - m)
    denom = jnp.sum(p, axis=-1, keepdims=True)
    probs = p * pl.reciprocal(denom, approx=True)
    out = jnp.dot(probs.astype(v.dtype), v, preferred_element_type=jnp.float32)
    o_ref[...] = out.astype(o_ref.dtype).reshape(o_ref.shape)


def attention(q, k, v, bias):
    """q,k,v: [B, heads, S, dh] (head-major), bias: [B,1,S] -> [B, heads, S, dh]."""
    B, heads, S, dh = q.shape
    blk = pl.BlockSpec((1, 1, S, dh), lambda b, h: (b, h, 0, 0))
    return pl.pallas_call(
        _attention_kernel,
        grid=(B, heads),
        in_specs=[
            pl.BlockSpec((1, 1, S), lambda b, h: (b, 0, 0)),   # mask, batch-indexed
            blk, blk, blk,
        ],
        out_specs=blk,
        out_shape=jax.ShapeDtypeStruct((B, heads, S, dh), q.dtype),
        compiler_params=pltpu.CompilerParams(
            dimension_semantics=("parallel", "parallel")),
    )(bias, q, k, v)


# ----------------------------------------------------------------------------
# Fused pooler(tanh) + dropout(identity at eval) + classifier head (tiny kernel)
# ----------------------------------------------------------------------------
def _head_kernel(cls_ref, pw_ref, pb_ref, cw_ref, cb_ref, o_ref):
    pooled = jnp.tanh(
        jnp.dot(cls_ref[...], pw_ref[...], preferred_element_type=jnp.float32)
        + pb_ref[...].astype(jnp.float32))
    # nn.Dropout(0.2) is identity at inference (eval-mode forward semantics)
    logits = jnp.dot(pooled.astype(cw_ref.dtype), cw_ref[...],
                     preferred_element_type=jnp.float32) + cb_ref[...].astype(jnp.float32)
    o_ref[...] = logits.astype(o_ref.dtype)


def classifier_head(cls_tok, pool_w, pool_b, cls_w, cls_b):
    B, H = cls_tok.shape
    C = cls_w.shape[1]
    return pl.pallas_call(
        _head_kernel,
        grid=(1,),
        in_specs=[
            pl.BlockSpec((B, H), lambda i: (0, 0)),
            pl.BlockSpec((H, H), lambda i: (0, 0)),
            pl.BlockSpec((1, H), lambda i: (0, 0)),
            pl.BlockSpec((H, C), lambda i: (0, 0)),
            pl.BlockSpec((1, C), lambda i: (0, 0)),
        ],
        out_specs=pl.BlockSpec((B, C), lambda i: (0, 0)),
        out_shape=jax.ShapeDtypeStruct((B, C), jnp.float32),
    )(cls_tok, pool_w, pool_b.reshape(1, H), cls_w, cls_b.reshape(1, C))


# ----------------------------------------------------------------------------
# Parameter init (deterministic, synthetic stand-in for pretrained PhoBERT).
# QKV weights concatenated into [H, 3H]; 1/sqrt(dh) folded into the q columns.
# Matmul weights bf16 (MXU fast path); embeddings / LN params / biases f32.
# ----------------------------------------------------------------------------
def init_params(key, *, vocab, hidden, heads, inter, layers, max_pos, num_classes):
    dh = hidden // heads
    scale = 1.0 / (dh ** 0.5)

    def nrm_f32(k, shape):
        return 0.02 * jax.random.normal(k, shape, dtype=jnp.float32)

    keys = iter(jax.random.split(key, 8 + 8 * layers))
    p = {
        "word_emb": nrm_f32(next(keys), (vocab, hidden)),
        "pos_emb": nrm_f32(next(keys), (max_pos, hidden)),
        "type_emb": nrm_f32(next(keys), (1, hidden)),
        "emb_ln_g": jnp.ones((hidden,), jnp.float32),
        "emb_ln_b": jnp.zeros((hidden,), jnp.float32),
        "pool_w": nrm_f32(next(keys), (hidden, hidden)).astype(jnp.bfloat16),
        "pool_b": jnp.zeros((hidden,), jnp.float32),
        "cls_w": nrm_f32(next(keys), (hidden, num_classes)).astype(jnp.bfloat16),
        "cls_b": jnp.zeros((num_classes,), jnp.float32),
        "layers": [],
    }
    for _ in range(layers):
        wq = nrm_f32(next(keys), (hidden, hidden))
        wk = nrm_f32(next(keys), (hidden, hidden))
        wv = nrm_f32(next(keys), (hidden, hidden))
        # Fold 1/sqrt(dh) into the q columns (for a real checkpoint: concat
        # [wq*scale | wk | wv] and [bq*scale | bk | bv] the same way).
        wqkv = jnp.concatenate([wq * scale, wk, wv], axis=1).astype(jnp.bfloat16)
        bqkv = jnp.zeros((3 * hidden,), jnp.float32)
        p["layers"].append({
            "wqkv": wqkv, "bqkv": bqkv,
            "wo": nrm_f32(next(keys), (hidden, hidden)).astype(jnp.bfloat16),
            "bo": jnp.zeros((hidden,), jnp.float32),
            "ln1_g": jnp.ones((hidden,), jnp.float32),
            "ln1_b": jnp.zeros((hidden,), jnp.float32),
            "w1": nrm_f32(next(keys), (hidden, inter)).astype(jnp.bfloat16),
            "b1": jnp.zeros((inter,), jnp.float32),
            "w2": nrm_f32(next(keys), (inter, hidden)).astype(jnp.bfloat16),
            "b2": jnp.zeros((hidden,), jnp.float32),
            "ln2_g": jnp.ones((hidden,), jnp.float32),
            "ln2_b": jnp.zeros((hidden,), jnp.float32),
        })
    return p


# ----------------------------------------------------------------------------
# Forward: phobert(input_ids, attention_mask) -> pooled -> dropout -> linear
# ----------------------------------------------------------------------------
def phobert_classifier_forward(params, input_ids, attention_mask, *, hidden, heads):
    B, S = input_ids.shape
    dh = hidden // heads
    padding_idx = 1  # RoBERTa convention
    compute_dtype = jnp.bfloat16

    # Embeddings (gathers / cumsum = plain-JAX glue)
    mask_i = attention_mask.astype(jnp.int32)
    pos_ids = jnp.cumsum(mask_i, axis=1) * mask_i + padding_idx
    x = (params["word_emb"][input_ids]
         + params["pos_emb"][pos_ids]
         + params["type_emb"][jnp.zeros_like(input_ids)])
    x = x.reshape(B * S, hidden)                                    # f32 [M,H]
    x = layernorm(x, params["emb_ln_g"], params["emb_ln_b"],
                  out_dtype=compute_dtype)                          # bf16 [M,H]

    # Additive attention mask, one row per batch: [B,1,S] f32
    bias = ((1.0 - attention_mask.astype(jnp.float32)) * -1e9)[:, None, :]

    for lyr in params["layers"]:
        # Fused QKV projection (resident [H,3H] weight, q pre-scaled): [M, 3H]
        qkv = linear(x, lyr["wqkv"], lyr["bqkv"])
        # head-major layout for attention: [3, B, heads, S, dh] (plain-JAX glue)
        qkv = jnp.transpose(qkv.reshape(B, S, 3, heads, dh), (2, 0, 3, 1, 4))
        ctx = attention(qkv[0], qkv[1], qkv[2], bias)               # [B,heads,S,dh]
        ctx = jnp.transpose(ctx, (0, 2, 1, 3)).reshape(B * S, hidden)
        # wo-linear fused with residual add + LayerNorm (ln1)
        x = linear_res_ln(ctx, lyr["wo"], lyr["bo"], x, lyr["ln1_g"], lyr["ln1_b"])
        # FFN: gelu linear, then w2-linear fused with residual add + LayerNorm (ln2)
        h = linear(x, lyr["w1"], lyr["b1"], act="gelu")
        x = linear_res_ln(h, lyr["w2"], lyr["b2"], x, lyr["ln2_g"], lyr["ln2_b"])

    # Pooler(tanh) + dropout(identity) + classifier, fused into one tiny kernel
    cls = x.reshape(B, S, hidden)[:, 0, :]
    logits = classifier_head(cls, params["pool_w"], params["pool_b"],
                             params["cls_w"], params["cls_b"])
    return logits


# ----------------------------------------------------------------------------
if __name__ == "__main__":
    B, S = 2, 8
    HIDDEN, HEADS, INTER, LAYERS = 32, 4, 64, 2
    VOCAB, MAX_POS, NUM_CLASSES = 64, 64, 3

    root = jax.random.PRNGKey(0)
    k_params, k_ids = jax.random.split(root)

    params = init_params(k_params, vocab=VOCAB, hidden=HIDDEN, heads=HEADS,
                         inter=INTER, layers=LAYERS, max_pos=MAX_POS,
                         num_classes=NUM_CLASSES)

    input_ids = jax.random.randint(k_ids, (B, S), 2, VOCAB, dtype=jnp.int32)
    attention_mask = jnp.ones((B, S), dtype=jnp.int32)
    attention_mask = attention_mask.at[1, S - 2:].set(0)  # pad tail of 2nd example

    logits = phobert_classifier_forward(params, input_ids, attention_mask,
                                        hidden=HIDDEN, heads=HEADS)
    logits = jax.block_until_ready(logits)

    assert logits.shape == (B, NUM_CLASSES)
    assert bool(jnp.all(jnp.isfinite(logits)))
    print("KERNEL_OK")
</pallas_src>

<mosaic_0001>
module attributes {stable_mosaic.version = 11 : i64} {
  func.func @_ln_kernel(%arg0: i32, %arg1: memref<16x32xf32, #tpu.memory_space<vmem>>, %arg2: memref<1x32xf32, #tpu.memory_space<vmem>>, %arg3: memref<1x32xf32, #tpu.memory_space<vmem>>, %arg4: memref<16x32xbf16, #tpu.memory_space<vmem>>) attributes {dimension_semantics = [#tpu.dimension_semantics<parallel>], iteration_bounds = array<i64: 1>, scalar_prefetch = 0 : i64, scratch_operands = 0 : i64, tpu.core_type = #tpu.core_type<tc>, window_params = [{transform_indices = @transform_0, window_bounds = array<i64: 16, 32>}, {pipeline_mode = #tpu.pipeline_mode<synchronous>, transform_indices = @transform_1, window_bounds = array<i64: 1, 32>}, {pipeline_mode = #tpu.pipeline_mode<synchronous>, transform_indices = @transform_2, window_bounds = array<i64: 1, 32>}, {transform_indices = @transform_3, window_bounds = array<i64: 16, 32>}]} {
    %c0 = arith.constant 0 : index
    %c0_0 = arith.constant 0 : index
    %0 = vector.load %arg1[%c0, %c0_0] : memref<16x32xf32, #tpu.memory_space<vmem>>, vector<16x32xf32>
    %cst = arith.constant dense<0.000000e+00> : vector<16xf32>
    %1 = vector.multi_reduction <add>, %0, %cst [1] : vector<16x32xf32> to vector<16xf32>
    %2 = vector.shape_cast %1 : vector<16xf32> to vector<16x1xf32>
    %cst_1 = arith.constant 3.200000e+01 : f32
    %3 = vector.broadcast %cst_1 : f32 to vector<16x1xf32>
    %4 = arith.divf %2, %3 : vector<16x1xf32>
    %5 = vector.broadcast %4 : vector<16x1xf32> to vector<16x32xf32>
    %6 = arith.subf %0, %5 : vector<16x32xf32>
    %7 = arith.mulf %6, %6 : vector<16x32xf32>
    %cst_2 = arith.constant dense<0.000000e+00> : vector<16xf32>
    %8 = vector.multi_reduction <add>, %7, %cst_2 [1] : vector<16x32xf32> to vector<16xf32>
    %9 = vector.shape_cast %8 : vector<16xf32> to vector<16x1xf32>
    %cst_3 = arith.constant 3.200000e+01 : f32
    %10 = vector.broadcast %cst_3 : f32 to vector<16x1xf32>
    %11 = arith.divf %9, %10 : vector<16x1xf32>
    %12 = vector.broadcast %4 : vector<16x1xf32> to vector<16x32xf32>
    %13 = arith.subf %0, %12 : vector<16x32xf32>
    %cst_4 = arith.constant 9.99999974E-6 : f32
    %14 = vector.broadcast %cst_4 : f32 to vector<16x1xf32>
    %15 = arith.addf %11, %14 : vector<16x1xf32>
    %16 = math.rsqrt %15 : vector<16x1xf32>
    %17 = vector.broadcast %16 : vector<16x1xf32> to vector<16x32xf32>
    %18 = arith.mulf %13, %17 : vector<16x32xf32>
    %c0_5 = arith.constant 0 : index
    %c0_6 = arith.constant 0 : index
    %19 = vector.load %arg2[%c0_5, %c0_6] : memref<1x32xf32, #tpu.memory_space<vmem>>, vector<1x32xf32>
    %20 = vector.broadcast %19 : vector<1x32xf32> to vector<16x32xf32>
    %21 = arith.mulf %18, %20 : vector<16x32xf32>
    %c0_7 = arith.constant 0 : index
    %c0_8 = arith.constant 0 : index
    %22 = vector.load %arg3[%c0_7, %c0_8] : memref<1x32xf32, #tpu.memory_space<vmem>>, vector<1x32xf32>
    %23 = vector.broadcast %22 : vector<1x32xf32> to vector<16x32xf32>
    %24 = arith.addf %21, %23 : vector<16x32xf32>
    %25 = arith.truncf %24 : vector<16x32xf32> to vector<16x32xbf16>
    %c0_9 = arith.constant 0 : index
    %c0_10 = arith.constant 0 : index
    %26 = vector.load %arg4[%c0_9, %c0_10] : memref<16x32xbf16, #tpu.memory_space<vmem>>, vector<16x32xbf16>
    tpu.vector_store %arg4[%c0_9, %c0_10], %25 {strides = array<i32>} : memref<16x32xbf16, #tpu.memory_space<vmem>>, vector<16x32xbf16>,
    return
  }
  func.func @transform_0(%arg0: i32) -> (i32, i32) {
    %c0_i32 = arith.constant 0 : i32
    %c0_i32_0 = arith.constant 0 : i32
    return %arg0, %c0_i32 : i32, i32
  }
  func.func @transform_1(%arg0: i32) -> (i32, i32) {
    %c0_i32 = arith.constant 0 : i32
    %c0_i32_0 = arith.constant 0 : i32
    %c0_i32_1 = arith.constant 0 : i32
    return %c0_i32, %c0_i32_0 : i32, i32
  }
  func.func @transform_2(%arg0: i32) -> (i32, i32) {
    %c0_i32 = arith.constant 0 : i32
    %c0_i32_0 = arith.constant 0 : i32
    %c0_i32_1 = arith.constant 0 : i32
    return %c0_i32, %c0_i32_0 : i32, i32
  }
  func.func @transform_3(%arg0: i32) -> (i32, i32) {
    %c0_i32 = arith.constant 0 : i32
    %c0_i32_0 = arith.constant 0 : i32
    return %arg0, %c0_i32 : i32, i32
  }
}

</mosaic_0001>

<llo_original>
// kernel: tpu_custom_call.1
$region0: #{tpu_custom_call.1}
  #allocation0 [shape = 'u32[]', space=smem, size = 0x4, offset = 0x4, fixed_abs, tag = 'smem constant byte address 0x4 - core index']
  #allocation1 [shape = 'u32[72,128]{1,0:T(1,128)}', space=vmem, size = 0x9000, scoped, tag = 'internal scratch']
  %s0 = inlined_call_operand.hbm [shape: f32[16,32], index: 0, kind: input, shape index: {}]
  %s1 = inlined_call_operand.hbm [shape: f32[1,32], index: 1, kind: input, shape index: {}]
  %s2 = inlined_call_operand.vmem [shape: f32[1,32], index: 2, kind: input, shape index: {}]
  %s3 = inlined_call_operand.hbm [shape: bf16[16,32], index: 3, kind: output, shape index: {}]
  %s4 = sld [smem:[#allocation0]]
  $region30: #{tpu_custom_call.1} parent=0
    _
  %s6 = ssub.s32 1, %s4
  %s7 = scalar_select 0, %s6, %s4
  $region1: #{tpu_custom_call.1} parent=0
    #allocation2 [shape = 'u8[8192]{0}', space=vmem, size = 0x2000, scoped, tag = 'input window, operand 0, single buffered']
    #allocation3 [shape = 's32[1]{0}', space=sflag, size = 0x4, scoped, tag = 'scoped memory for tpu_custom_call.1']
    #allocation4 [shape = 's32[1]{0}', space=sflag, size = 0x4, scoped, tag = 'scoped memory for tpu_custom_call.1']
    #allocation5 [shape = 'u8[512]{0}', space=vmem, size = 0x400, scoped, tag = 'input window, operand 1, single buffered']
    #allocation6 [shape = 's32[1]{0}', space=sflag, size = 0x4, scoped, tag = 'scoped memory for tpu_custom_call.1']
    #allocation7 [shape = 'u8[4096]{0}', space=vmem, size = 0x1000, scoped, tag = 'output window, operand 0, single buffered']
    %8 = vsyncpa [#allocation3], 0
    %9 = vsyncpa [#allocation6], 0
    %10 = vsyncpa [#allocation4], 0
    // Predicated region
    $region2: #{tpu_custom_call.1} parent=1 // pred_check
      _
    $region3: #{tpu_custom_call.1} parent=1 // pred_check_branch
      %12 = sbr.rel (0) target = $region5
    $region4: #{tpu_custom_call.1} parent=1 // pred_region
      %14 = vsyncadd [#allocation3], 0
      %s15 = sshll.u32 %s0, 4
      %s16 = int_to_ptr.hbm [resolvable:$true] %s15
      %s17 = sshll.u32 [#allocation2], 4
      %s18 = int_to_ptr.vmem [resolvable:$true] %s17
      %23 = dma.hbm_to_vmem [thread:$0]  %s16, 256, %s18, [#allocation3], 128, 128, 8
    $region5: #{tpu_custom_call.1} parent=1 // pred_fallthru
      _
    // Predicated region
    $region6: #{tpu_custom_call.1} parent=1 // pred_check
      _
    $region7: #{tpu_custom_call.1} parent=1 // pred_check_branch
      %25 = sbr.rel (0) target = $region9
    $region8: #{tpu_custom_call.1} parent=1 // pred_region
      %27 = vsyncadd [#allocation6], 0
      %s29 = sshll.u32 %s1, 4
      %s30 = int_to_ptr.hbm [resolvable:$true] %s29
      %s31 = sshll.u32 [#allocation5], 4
      %s32 = int_to_ptr.vmem [resolvable:$true] %s31
      %34 = dma.hbm_to_vmem [thread:$0]  %s30, 16, %s32, [#allocation6]
    $region9: #{tpu_custom_call.1} parent=1 // pred_fallthru
      _
    // Predicated region
    $region10: #{tpu_custom_call.1} parent=1 // pred_check
      _
    $region11: #{tpu_custom_call.1} parent=1 // pred_check_branch
      %36 = sbr.rel (0) target = $region13
    $region12: #{tpu_custom_call.1} parent=1 // pred_region
      _
    $region13: #{tpu_custom_call.1} parent=1 // pred_fallthru
      _
    // Predicated region
    $region14: #{tpu_custom_call.1} parent=1 // pred_check
      _
    $region15: #{tpu_custom_call.1} parent=1 // pred_check_branch
      %38 = sbr.rel (0) target = $region17
    $region16: #{tpu_custom_call.1} parent=1 // pred_region
      %40 = dma.done [#allocation3], 256
    $region17: #{tpu_custom_call.1} parent=1 // pred_fallthru
      _
    // Predicated region
    $region18: #{tpu_custom_call.1} parent=1 // pred_check
      _
    $region19: #{tpu_custom_call.1} parent=1 // pred_check_branch
      %42 = sbr.rel (0) target = $region21
    $region20: #{tpu_custom_call.1} parent=1 // pred_region
      %44 = dma.done [#allocation6], 16
    $region21: #{tpu_custom_call.1} parent=1 // pred_fallthru
      _
    %v45 = vld [vmem:[#allocation2] sm:$0xff]
    %v46 = vld [vmem:[#allocation2 + $0x8] sm:$0xff]
    %vm47 = vcmask 261120
    %v48 = vsel %vm47, %v45, 0.0
    %49 = vadd.xlane.f32.xlu0 %v48
    %v50 = vpop.xlane.xlu0 %49
    %v51 = vsel %vm47, %v46, 0.0
    %52 = vadd.xlane.f32.xlu0 %v51
    %v53 = vpop.xlane.xlu0 %52
    %v54 = vrcp.pop 32.0
    %v55 = vmul.f32 32.0, %v54
    %v56 = vsub.f32 1.0, %v55
    %v57 = vmul.f32 %v54, %v56
    %v58 = vadd.f32 %v54, %v57
    %vm59 = vweird.f32 %v54
    %v60 = vsel %vm59, %v54, %v58
    %v61 = vmul.f32 %v50, %v60
    %v62 = vmul.f32 %v53, %v60
    %v63 = vsub.f32 %v45, %v61
    %v64 = vsub.f32 %v46, %v62
    %v65 = vmul.f32 %v63, %v63
    %v66 = vmul.f32 %v64, %v64
    %v67 = vsel %vm47, %v65, 0.0
    %68 = vadd.xlane.f32.xlu0 %v67
    %v69 = vpop.xlane.xlu0 %68
    %v70 = vsel %vm47, %v66, 0.0
    %71 = vadd.xlane.f32.xlu0 %v70
    %v72 = vpop.xlane.xlu0 %71
    %v73 = vmul.f32 %v69, %v60
    %v74 = vmul.f32 %v72, %v60
    %v75 = vadd.f32 %v73, 1e-05
    %v76 = vadd.f32 %v74, 1e-05
    %v77 = vrsqrt.pop %v75
    %v78 = vmul.f32 %v77, %v75
    %v79 = vmul.f32 %v78, %v77
    %v80 = vmul.f32 0.5, %v79
    %v81 = vsub.f32 1.5, %v80
    %v82 = vmul.f32 %v77, %v81
    %vm83 = vweird.f32 %v75
    %vm84 = vweird.f32 %v77
    %vm85 = vmor %vm83, %vm84
    %v86 = vsel %vm85, %v77, %v82
    %v87 = vrsqrt.pop %v76
    %v88 = vmul.f32 %v87, %v76
    %v89 = vmul.f32 %v88, %v87
    %v90 = vmul.f32 0.5, %v89
    %v91 = vsub.f32 1.5, %v90
    %v92 = vmul.f32 %v87, %v91
    %vm93 = vweird.f32 %v76
    %vm94 = vweird.f32 %v87
    %vm95 = vmor %vm93, %vm94
    %v96 = vsel %vm95, %v87, %v92
    %v97 = vmul.f32 %v63, %v86
    %v98 = vmul.f32 %v64, %v96
    %v99 = vld [vmem:[#allocation5] sm:$0x1]
    %v101 = vperm.slane %v99, 0
    %v103 = vmul.f32 %v97, %v101
    %v104 = vmul.f32 %v98, %v101
    %v105 = vld [vmem:[%s2] sm:$0x1]
    %v107 = vperm.slane %v105, 0
    %v109 = vadd.f32 %v103, %v107
    %v110 = vadd.f32 %v104, %v107
    %v111 = vpack.c.bf16 %v109, %v109
    %v112 = vpack.c.bf16 %v110, %v110
    %vm113 = vcmask 257024
    %114 = vst.msk [vmem:[#allocation7] sm:$0xf] %vm113, %v111
    %115 = vst.msk [vmem:[#allocation7 + $0x4] sm:$0xf] %vm113, %v112
    // Predicated region
    $region22: #{tpu_custom_call.1} parent=1 // pred_check
      _
    $region23: #{tpu_custom_call.1} parent=1 // pred_check_branch
      %117 = sbr.rel (0) target = $region25
    $region24: #{tpu_custom_call.1} parent=1 // pred_region
      %119 = vsyncadd [#allocation4], 0
      %s120 = sshll.u32 [#allocation7], 4
      %s121 = int_to_ptr.vmem [resolvable:$true] %s120
      %s122 = sshll.u32 %s3, 4
      %s123 = int_to_ptr.hbm [resolvable:$true] %s122
      %128 = dma.vmem_to_hbm [thread:$0]  %s121, 128, %s123, [#allocation4], 64, 64, 4
    $region25: #{tpu_custom_call.1} parent=1 // pred_fallthru
      _
    // Predicated region
    $region26: #{tpu_custom_call.1} parent=1 // pred_check
      _
    $region27: #{tpu_custom_call.1} parent=1 // pred_check_branch
      %130 = sbr.rel (0) target = $region29
    $region28: #{tpu_custom_call.1} parent=1 // pred_region
      %132 = dma.done [#allocation4], 128
    $region29: #{tpu_custom_call.1} parent=1 // pred_fallthru
      _
    %133 = vsyncpa [#allocation3], 1
    %134 = vsyncpa [#allocation6], 1
    %135 = vsyncpa [#allocation4], 1

</llo_original>
